<compile_context>
chip_gen: v5e
topology: v5e:2x2
jax: 0.10.0
libtpu: 0.0.40
codegen_flags: <defaults>
</compile_context>

<pallas_src>
import functools

import numpy as np
import jax
import jax.numpy as jnp
from jax.experimental import pallas as pl
from jax.experimental.pallas import tpu as pltpu

_EXP_CLAMP = 85.0  # keep factorized exponentials finite in f32/bf16


def _round_up(x, m):
    return ((x + m - 1) // m) * m


def _vmem_capacity_bytes():
    try:
        return int(pltpu.get_tpu_info().vmem_capacity_bytes)
    except Exception:
        return 64 * 1024 * 1024  # conservative fallback (v7x per-core VMEM)


def _hawkes_kernel(tref_ref, ats_ref, ntsc_ref, ntsr_ref, alpha_ref, beta_ref,
                   out_ref, acc_ref):
    mo = pl.program_id(1)
    mi = pl.program_id(2)
    m_inner = pl.num_programs(2)

    @pl.when(mi == 0)
    def _init():
        acc_ref[...] = jnp.zeros_like(acc_ref)

    # Per-tile reference time (tile midpoint), precomputed on the host.
    tref = tref_ref[mo * m_inner + mi]

    ats = ats_ref[...]        # (1, TM)  all-timestamps tile (pad = max real ts)
    nts_c = ntsc_ref[...]     # (T, 1)   neuron-i timestamps  (pad = -1)
    nts_r = ntsr_ref[...]     # (1, T)
    beta = beta_ref[...]      # (Np, 1)  beta[i, :] zero-padded

    # V[t,a] = 1 iff t_n[t] > t_a[a]; sentinel padding makes every padded
    # row/column exactly zero, so no mask streams are needed.
    validf = (nts_c > ats).astype(jnp.bfloat16)                      # (T, TM)

    # r[j,t] = exp(beta_ij*(tref - t_n[t])) (clamped -> finite; padded t hits V==0)
    r_jt = jnp.exp(jnp.minimum(beta * (tref - nts_r), _EXP_CLAMP))   # (Np, T) f32
    r_jt = r_jt.astype(jnp.bfloat16)

    # Single bf16 MXU pass contracting the (small) T axis; TILE_M is the output dim.
    w = jnp.dot(r_jt, validf, preferred_element_type=jnp.float32)    # (Np, TM)

    # c[j,a] = exp(beta_ij*(t_a[a] - tref)); padded a columns already have W == 0.
    c_ja = jnp.exp(jnp.minimum(beta * (ats - tref), _EXP_CLAMP))     # (Np, TM) f32

    # Per-j accumulation; alpha weighting deferred to finalize.
    acc_ref[...] += jnp.sum(c_ja * w, axis=1, keepdims=True)         # (Np, 1)

    @pl.when(mi == m_inner - 1)
    def _finalize():
        out_ref[...] = jnp.sum(alpha_ref[...] * acc_ref[...],
                               axis=0, keepdims=True)                # (1, 1)


@functools.partial(jax.jit, static_argnames=("tile_m", "m_split"))
def _hawkes_ll_device(trefs, ats_row, nts_col, nts_row, alpha_col, beta_col, mu,
                      *, tile_m, m_split):
    num_neurons, t_pad, _ = nts_col.shape
    m_pad = ats_row.shape[1]
    n_pad = alpha_col.shape[1]
    m_total = m_pad // tile_m
    m_inner = m_total // m_split

    # Per-tile working set (bytes per lane of the M tile): bf16 pair matrix,
    # (Np, TM) f32 matmul output / c / exp-arg temps, double-buffered ats rows.
    per_lane = 4 * t_pad + 16 * n_pad + 96
    resident = 2 * (512 * t_pad + 32 * t_pad + 1024 * n_pad) + (1 << 20)
    vmem_cap = _vmem_capacity_bytes()
    vmem_limit = int(min(vmem_cap * 3 // 4,
                         max(32 << 20, 2 * per_lane * tile_m + resident)))

    grid_spec = pltpu.PrefetchScalarGridSpec(
        num_scalar_prefetch=0,
        grid=(num_neurons, m_split, m_inner),
        in_specs=[
            pl.BlockSpec(memory_space=pltpu.MemorySpace.SMEM),                  # trefs
            pl.BlockSpec((1, tile_m), lambda i, mo, mi: (0, mo * m_inner + mi)),# ats
            pl.BlockSpec((None, t_pad, 1), lambda i, mo, mi: (i, 0, 0)),        # nts col
            pl.BlockSpec((None, 1, t_pad), lambda i, mo, mi: (i, 0, 0)),        # nts row
            pl.BlockSpec((None, n_pad, 1), lambda i, mo, mi: (i, 0, 0)),        # alpha
            pl.BlockSpec((None, n_pad, 1), lambda i, mo, mi: (i, 0, 0)),        # beta
        ],
        out_specs=pl.BlockSpec((None, None, 1, 1), lambda i, mo, mi: (mo, i, 0, 0)),
        scratch_shapes=[pltpu.VMEM((n_pad, 1), jnp.float32)],
    )

    excit = pl.pallas_call(
        _hawkes_kernel,
        out_shape=jax.ShapeDtypeStruct((m_split, num_neurons, 1, 1), jnp.float32),
        grid_spec=grid_spec,
        compiler_params=pltpu.CompilerParams(
            dimension_semantics=("parallel", "parallel", "arbitrary"),
            vmem_limit_bytes=vmem_limit),
    )(trefs, ats_row, nts_col, nts_row, alpha_col, beta_col)

    lam = mu + jnp.sum(excit[:, :, 0, 0], axis=0)        # (num_neurons,)
    return jnp.sum(jnp.log1p(lam - 1.0) - lam)


def _prepare_inputs(spike_trains, mu, alpha, beta):
    """Host-side glue reproducing torch.cat + torch.nonzero + slicing."""
    spike_np = [np.asarray(jax.device_get(s)) for s in spike_trains]
    num_neurons = len(spike_np)
    lens = [int(s.shape[0]) for s in spike_np]
    cat = np.concatenate(spike_np, axis=0)
    all_ts = np.nonzero(cat)[0].astype(np.float32)        # sorted ascending
    n_events = int(all_ts.shape[0])
    maxts = float(all_ts[-1]) if n_events > 0 else 0.0

    t_pad = _round_up(max(max(lens), 1), 16)              # bf16-friendly sublanes
    n_pad = _round_up(max(num_neurons, 1), 16)

    # M tile: multiple of 128 lanes, sized so the per-tile working set stays
    # within ~1/6 of this generation's VMEM (64 MiB v7x, 128 MiB v5e/v6e).
    vmem_cap = _vmem_capacity_bytes()
    budget = max(2 << 20, min(vmem_cap // 6, 24 << 20))
    per_lane = 4 * t_pad + 16 * n_pad + 96
    tile_m = max(128, (budget // per_lane) // 128 * 128)
    tile_m = min(tile_m, 8192, _round_up(max(n_events, 1), 128))

    m_tiles = -(-max(n_events, 1) // tile_m)
    # v7x megacore: neuron axis is the primary parallel split; if it can't
    # balance 2 TensorCores, also split M into per-core partials (summed outside).
    m_split = 2 if (m_tiles > 1 and num_neurons % 2 == 1) else 1
    m_split = min(m_split, m_tiles)
    m_inner = -(-m_tiles // m_split)
    m_total = m_split * m_inner
    m_pad = m_total * tile_m

    # Sentinel padding (replaces the validity-mask inputs):
    #   nts pad = -1          -> never strictly greater than any real/padded t_a.
    #   ats pad = max real ts -> no real/padded t_n is strictly greater.
    ats_row = np.full((1, m_pad), maxts, np.float32)
    ats_row[0, :n_events] = all_ts

    # Per-tile reference time = midpoint of the tile's real timestamps.
    trefs = np.full((m_total,), maxts, np.float32)
    for k in range(m_total):
        lo, hi = k * tile_m, min((k + 1) * tile_m, n_events)
        if hi > lo:
            trefs[k] = 0.5 * (float(all_ts[lo]) + float(all_ts[hi - 1]))

    nts_col = np.full((num_neurons, t_pad, 1), -1.0, np.float32)
    nts_row = np.full((num_neurons, 1, t_pad), -1.0, np.float32)
    off = 0
    for i in range(num_neurons):
        # same (intentional) slicing convention as the torch model:
        # all_timestamps[offset : offset + len(spike_trains[i])]
        seg = all_ts[off:off + lens[i]]
        off += lens[i]
        nts_col[i, :seg.shape[0], 0] = seg
        nts_row[i, 0, :seg.shape[0]] = seg

    alpha_np = np.asarray(jax.device_get(alpha), np.float32)
    beta_np = np.asarray(jax.device_get(beta), np.float32)
    alpha_col = np.zeros((num_neurons, n_pad, 1), np.float32)
    beta_col = np.zeros((num_neurons, n_pad, 1), np.float32)
    alpha_col[:, :num_neurons, 0] = alpha_np     # padded j: alpha=0 -> contributes 0
    beta_col[:, :num_neurons, 0] = beta_np
    mu_np = np.asarray(jax.device_get(mu), np.float32)

    arrays = dict(
        trefs=jnp.asarray(trefs), ats_row=jnp.asarray(ats_row),
        nts_col=jnp.asarray(nts_col), nts_row=jnp.asarray(nts_row),
        alpha_col=jnp.asarray(alpha_col), beta_col=jnp.asarray(beta_col),
        mu=jnp.asarray(mu_np))
    return arrays, tile_m, m_split


def hawkes_log_likelihood(spike_trains, mu, alpha, beta):
    """Pallas implementation of HawkesProcessModel.forward(spike_trains)."""
    arrays, tile_m, m_split = _prepare_inputs(spike_trains, mu, alpha, beta)
    return _hawkes_ll_device(
        arrays["trefs"], arrays["ats_row"], arrays["nts_col"], arrays["nts_row"],
        arrays["alpha_col"], arrays["beta_col"], arrays["mu"],
        tile_m=tile_m, m_split=m_split)


def _reference_log_likelihood(spike_trains, mu, alpha, beta):
    """Pure numpy re-implementation of the torch forward (for validation)."""
    spike_np = [np.asarray(jax.device_get(s)) for s in spike_trains]
    cat = np.concatenate(spike_np, axis=0)
    all_ts = np.nonzero(cat)[0].astype(np.float64)
    mu = np.asarray(mu, np.float64)
    alpha = np.asarray(alpha, np.float64)
    beta = np.asarray(beta, np.float64)
    ll = 0.0
    off = 0
    n = len(spike_np)
    for i in range(n):
        nts = all_ts[off:off + spike_np[i].shape[0]]
        off += spike_np[i].shape[0]
        lam = float(mu[i])
        for j in range(n):
            for t_j in all_ts:
                td = nts - t_j
                td = td[td > 0]
                lam += float(np.sum(alpha[i, j] * np.exp(-beta[i, j] * td)))
        ll += np.log1p(lam - 1.0) - lam
    return ll


if __name__ == "__main__":
    num_neurons = 4
    seq_len = 16
    prior_params = {"mu_prior": 0.5, "alpha_prior": 0.1, "beta_prior": 1.0}

    # deterministic parameters (torch.full equivalents)
    mu = jnp.full((num_neurons,), prior_params["mu_prior"], dtype=jnp.float32)
    alpha = jnp.full((num_neurons, num_neurons), prior_params["alpha_prior"],
                     dtype=jnp.float32)
    beta = jnp.full((num_neurons, num_neurons), prior_params["beta_prior"],
                    dtype=jnp.float32)

    # deterministic binary spike trains (list of per-neuron tensors)
    key = jax.random.PRNGKey(0)
    keys = jax.random.split(key, num_neurons)
    spike_trains = [
        (jax.random.uniform(keys[i], (seq_len,)) < 0.3).astype(jnp.float32)
        for i in range(num_neurons)
    ]

    ll = hawkes_log_likelihood(spike_trains, mu, alpha, beta)
    ll = jax.block_until_ready(ll)

    ref = _reference_log_likelihood(spike_trains, mu, alpha, beta)
    # bf16 single-pass MXU operands -> allow ~0.3% relative drift vs f64 reference.
    assert abs(float(ll) - ref) < 3e-3 * max(1.0, abs(ref)), (float(ll), ref)

    print("KERNEL_OK")
</pallas_src>

<mosaic_0001>
module attributes {stable_mosaic.version = 11 : i64} {
  func.func @_hawkes_kernel(%arg0: i32, %arg1: i32, %arg2: i32, %arg3: memref<1xf32, #tpu.memory_space<smem>>, %arg4: memref<1x128xf32, #tpu.memory_space<vmem>>, %arg5: memref<1x16x1xf32, #tpu.memory_space<vmem>>, %arg6: memref<1x1x16xf32, #tpu.memory_space<vmem>>, %arg7: memref<1x16x1xf32, #tpu.memory_space<vmem>>, %arg8: memref<1x16x1xf32, #tpu.memory_space<vmem>>, %arg9: memref<1x1x1x1xf32, #tpu.memory_space<vmem>>, %arg10: memref<16x1xf32, #tpu.memory_space<vmem>>) attributes {dimension_semantics = [#tpu.dimension_semantics<parallel>, #tpu.dimension_semantics<parallel>, #tpu.dimension_semantics<arbitrary>], iteration_bounds = array<i64: 4, 1, 1>, scalar_prefetch = 0 : i64, scratch_operands = 1 : i64, tpu.core_type = #tpu.core_type<tc>, window_params = [{transform_indices = @transform_0, window_bounds = array<i64: 1>}, {transform_indices = @transform_1, window_bounds = array<i64: 1, 128>}, {transform_indices = @transform_2, window_bounds = array<i64: 1, 16, 1>}, {transform_indices = @transform_3, window_bounds = array<i64: 1, 1, 16>}, {transform_indices = @transform_4, window_bounds = array<i64: 1, 16, 1>}, {transform_indices = @transform_5, window_bounds = array<i64: 1, 16, 1>}, {transform_indices = @transform_6, window_bounds = array<i64: 1, 1, 1, 1>}]} {
    %c0_i32 = arith.constant 0 : i32
    %0 = arith.cmpi eq, %arg2, %c0_i32 : i32
    %1 = arith.extui %0 : i1 to i32
    %c0_i32_0 = arith.constant 0 : i32
    %2 = arith.cmpi ne, %1, %c0_i32_0 : i32
    scf.if %2 {
      %cst_20 = arith.constant 0.000000e+00 : f32
      %47 = vector.broadcast %cst_20 : f32 to vector<16x1xf32>
      %c0_21 = arith.constant 0 : index
      %c0_22 = arith.constant 0 : index
      %48 = vector.load %arg10[%c0_21, %c0_22] : memref<16x1xf32, #tpu.memory_space<vmem>>, vector<16x1xf32>
      tpu.vector_store %arg10[%c0_21, %c0_22], %47 {strides = array<i32>} : memref<16x1xf32, #tpu.memory_space<vmem>>, vector<16x1xf32>,
    } else {
    }
    %c1_i32 = arith.constant 1 : i32
    %3 = arith.muli %arg1, %c1_i32 : i32
    %4 = arith.addi %3, %arg2 : i32
    %5 = arith.index_cast %4 : i32 to index
    %6 = memref.load %arg3[%5] : memref<1xf32, #tpu.memory_space<smem>>
    %c0 = arith.constant 0 : index
    %c0_1 = arith.constant 0 : index
    %7 = vector.load %arg4[%c0, %c0_1] : memref<1x128xf32, #tpu.memory_space<vmem>>, vector<1x128xf32>
    %c0_2 = arith.constant 0 : index
    %c0_3 = arith.constant 0 : index
    %c0_4 = arith.constant 0 : index
    %8 = vector.load %arg5[%c0_2, %c0_3, %c0_4] : memref<1x16x1xf32, #tpu.memory_space<vmem>>, vector<1x16x1xf32>
    %9 = vector.shape_cast %8 : vector<1x16x1xf32> to vector<16x1xf32>
    %c0_5 = arith.constant 0 : index
    %c0_6 = arith.constant 0 : index
    %c0_7 = arith.constant 0 : index
    %10 = vector.load %arg6[%c0_5, %c0_6, %c0_7] : memref<1x1x16xf32, #tpu.memory_space<vmem>>, vector<1x1x16xf32>
    %11 = vector.shape_cast %10 : vector<1x1x16xf32> to vector<1x16xf32>
    %c0_8 = arith.constant 0 : index
    %c0_9 = arith.constant 0 : index
    %c0_10 = arith.constant 0 : index
    %12 = vector.load %arg8[%c0_8, %c0_9, %c0_10] : memref<1x16x1xf32, #tpu.memory_space<vmem>>, vector<1x16x1xf32>
    %13 = vector.shape_cast %12 : vector<1x16x1xf32> to vector<16x1xf32>
    %14 = vector.broadcast %9 : vector<16x1xf32> to vector<16x128xf32>
    %15 = vector.broadcast %7 : vector<1x128xf32> to vector<16x128xf32>
    %16 = arith.cmpf ogt, %14, %15 : vector<16x128xf32>
    %17 = arith.extui %16 : vector<16x128xi1> to vector<16x128xi32>
    %18 = arith.sitofp %17 : vector<16x128xi32> to vector<16x128xf32>
    %19 = arith.truncf %18 : vector<16x128xf32> to vector<16x128xbf16>
    %20 = vector.broadcast %6 : f32 to vector<1x16xf32>
    %21 = arith.subf %20, %11 : vector<1x16xf32>
    %22 = vector.broadcast %13 : vector<16x1xf32> to vector<16x16xf32>
    %23 = vector.broadcast %21 : vector<1x16xf32> to vector<16x16xf32>
    %24 = arith.mulf %22, %23 : vector<16x16xf32>
    %cst = arith.constant 8.500000e+01 : f32
    %25 = vector.broadcast %cst : f32 to vector<16x16xf32>
    %26 = arith.minimumf %24, %25 : vector<16x16xf32>
    %27 = math.exp %26 : vector<16x16xf32>
    %28 = arith.truncf %27 : vector<16x16xf32> to vector<16x16xbf16>
    %cst_11 = arith.constant dense<0.000000e+00> : vector<16x128xf32>
    %29 = tpu.matmul %28, %19, %cst_11 {dimension_numbers = #tpu.dot_dimension_numbers<[1], [0], [0], [1], [0, 0, 1, 1], [], []>} : vector<16x16xbf16>, vector<16x128xbf16>, vector<16x128xf32> -> vector<16x128xf32>
    %30 = vector.broadcast %6 : f32 to vector<1x128xf32>
    %31 = arith.subf %7, %30 : vector<1x128xf32>
    %32 = vector.broadcast %13 : vector<16x1xf32> to vector<16x128xf32>
    %33 = vector.broadcast %31 : vector<1x128xf32> to vector<16x128xf32>
    %34 = arith.mulf %32, %33 : vector<16x128xf32>
    %cst_12 = arith.constant 8.500000e+01 : f32
    %35 = vector.broadcast %cst_12 : f32 to vector<16x128xf32>
    %36 = arith.minimumf %34, %35 : vector<16x128xf32>
    %37 = math.exp %36 : vector<16x128xf32>
    %c0_13 = arith.constant 0 : index
    %c0_14 = arith.constant 0 : index
    %38 = vector.load %arg10[%c0_13, %c0_14] : memref<16x1xf32, #tpu.memory_space<vmem>>, vector<16x1xf32>
    %39 = arith.mulf %37, %29 : vector<16x128xf32>
    %cst_15 = arith.constant dense<0.000000e+00> : vector<16xf32>
    %40 = vector.multi_reduction <add>, %39, %cst_15 [1] : vector<16x128xf32> to vector<16xf32>
    %41 = vector.shape_cast %40 : vector<16xf32> to vector<16x1xf32>
    %42 = arith.addf %38, %41 : vector<16x1xf32>
    %c0_16 = arith.constant 0 : index
    %c0_17 = arith.constant 0 : index
    %43 = vector.load %arg10[%c0_16, %c0_17] : memref<16x1xf32, #tpu.memory_space<vmem>>, vector<16x1xf32>
    tpu.vector_store %arg10[%c0_16, %c0_17], %42 {strides = array<i32>} : memref<16x1xf32, #tpu.memory_space<vmem>>, vector<16x1xf32>,
    %c0_i32_18 = arith.constant 0 : i32
    %44 = arith.cmpi eq, %arg2, %c0_i32_18 : i32
    %45 = arith.extui %44 : i1 to i32
    %c0_i32_19 = arith.constant 0 : i32
    %46 = arith.cmpi ne, %45, %c0_i32_19 : i32
    scf.if %46 {
      %c0_20 = arith.constant 0 : index
      %c0_21 = arith.constant 0 : index
      %c0_22 = arith.constant 0 : index
      %47 = vector.load %arg7[%c0_20, %c0_21, %c0_22] : memref<1x16x1xf32, #tpu.memory_space<vmem>>, vector<1x16x1xf32>
      %48 = vector.shape_cast %47 : vector<1x16x1xf32> to vector<16x1xf32>
      %c0_23 = arith.constant 0 : index
      %c0_24 = arith.constant 0 : index
      %49 = vector.load %arg10[%c0_23, %c0_24] : memref<16x1xf32, #tpu.memory_space<vmem>>, vector<16x1xf32>
      %50 = arith.mulf %48, %49 : vector<16x1xf32>
      %cst_25 = arith.constant dense<0.000000e+00> : vector<1xf32>
      %51 = vector.multi_reduction <add>, %50, %cst_25 [0] : vector<16x1xf32> to vector<1xf32>
      %52 = vector.shape_cast %51 : vector<1xf32> to vector<1x1xf32>
      %c0_26 = arith.constant 0 : index
      %c0_27 = arith.constant 0 : index
      %c0_28 = arith.constant 0 : index
      %c0_29 = arith.constant 0 : index
      %53 = vector.load %arg9[%c0_26, %c0_27, %c0_28, %c0_29] : memref<1x1x1x1xf32, #tpu.memory_space<vmem>>, vector<1x1x1x1xf32>
      %54 = vector.shape_cast %53 : vector<1x1x1x1xf32> to vector<1x1xf32>
      %55 = vector.shape_cast %52 : vector<1x1xf32> to vector<1x1x1x1xf32>
      tpu.vector_store %arg9[%c0_26, %c0_27, %c0_28, %c0_29], %55 {strides = array<i32>} : memref<1x1x1x1xf32, #tpu.memory_space<vmem>>, vector<1x1x1x1xf32>,
    } else {
    }
    return
  }
  func.func @transform_0(%arg0: i32, %arg1: i32, %arg2: i32) -> i32 {
    %c0_i32 = arith.constant 0 : i32
    %c0_i32_0 = arith.constant 0 : i32
    return %c0_i32 : i32
  }
  func.func @transform_1(%arg0: i32, %arg1: i32, %arg2: i32) -> (i32, i32) {
    %c1_i32 = arith.constant 1 : i32
    %0 = arith.muli %arg1, %c1_i32 : i32
    %1 = arith.addi %0, %arg2 : i32
    %c0_i32 = arith.constant 0 : i32
    %c0_i32_0 = arith.constant 0 : i32
    return %c0_i32, %1 : i32, i32
  }
  func.func @transform_2(%arg0: i32, %arg1: i32, %arg2: i32) -> (i32, i32, i32) {
    %c0_i32 = arith.constant 0 : i32
    %c0_i32_0 = arith.constant 0 : i32
    %c0_i32_1 = arith.constant 0 : i32
    return %arg0, %c0_i32, %c0_i32_0 : i32, i32, i32
  }
  func.func @transform_3(%arg0: i32, %arg1: i32, %arg2: i32) -> (i32, i32, i32) {
    %c0_i32 = arith.constant 0 : i32
    %c0_i32_0 = arith.constant 0 : i32
    %c0_i32_1 = arith.constant 0 : i32
    return %arg0, %c0_i32, %c0_i32_0 : i32, i32, i32
  }
  func.func @transform_4(%arg0: i32, %arg1: i32, %arg2: i32) -> (i32, i32, i32) {
    %c0_i32 = arith.constant 0 : i32
    %c0_i32_0 = arith.constant 0 : i32
    %c0_i32_1 = arith.constant 0 : i32
    return %arg0, %c0_i32, %c0_i32_0 : i32, i32, i32
  }
  func.func @transform_5(%arg0: i32, %arg1: i32, %arg2: i32) -> (i32, i32, i32) {
    %c0_i32 = arith.constant 0 : i32
    %c0_i32_0 = arith.constant 0 : i32
    %c0_i32_1 = arith.constant 0 : i32
    return %arg0, %c0_i32, %c0_i32_0 : i32, i32, i32
  }
  func.func @transform_6(%arg0: i32, %arg1: i32, %arg2: i32) -> (i32, i32, i32, i32) {
    %c0_i32 = arith.constant 0 : i32
    %c0_i32_0 = arith.constant 0 : i32
    %c0_i32_1 = arith.constant 0 : i32
    return %arg1, %arg0, %c0_i32, %c0_i32_0 : i32, i32, i32, i32
  }
}

</mosaic_0001>

<llo_original>
// kernel: _hawkes_ll_device.1
$region0: #{_hawkes_ll_device.1}
  #allocation0 [shape = 'u32[]', space=smem, size = 0x4, offset = 0x4, fixed_abs, tag = 'smem constant byte address 0x4 - core index']
  #allocation1 [shape = 'u32[72,128]{1,0:T(1,128)}', space=vmem, size = 0x9000, scoped, tag = 'internal scratch']
  #allocation2 [shape = 'f32[16,1]{1,0:T(8,128)}', space=vmem, size = 0x2000, scoped, tag = 'scratch operand']
  #allocation3 [shape = 'f32[1]{0:T(128)S(6)}', space=smem, size = 0x200, scoped, tag = 'scoped memory for _hawkes_ll_device.1']
  %s0 = inlined_call_operand.<no memory space> [shape: f32[1], index: 0, kind: input, shape index: {}]
  %s1 = inlined_call_operand.vmem [shape: f32[1,128], index: 1, kind: input, shape index: {}]
  %s2 = inlined_call_operand.vmem [shape: f32[4,16,1], index: 2, kind: input, shape index: {}]
  %s3 = inlined_call_operand.vmem [shape: f32[4,1,16], index: 3, kind: input, shape index: {}]
  %s4 = inlined_call_operand.vmem [shape: f32[4,16,1], index: 4, kind: input, shape index: {}]
  %s5 = inlined_call_operand.vmem [shape: f32[4,16,1], index: 5, kind: input, shape index: {}]
  %s6 = inlined_call_operand.vmem [shape: f32[1,4,1,1], index: 6, kind: output, shape index: {}]
  %s7 = sld [smem:[#allocation0]]
  $region65: #{_hawkes_ll_device.1} parent=0
    _
  %s9 = ssub.s32 1, %s7
  %s10 = scalar_select 0, %s9, %s7
  %11 = sst [smem:[#allocation3]] %s0
  loop: start=0, step=1, limit=6
  $region2: #{_hawkes_ll_device.1} parent=0 // loop_pre_header
    _
  $region3: #{_hawkes_ll_device.1} parent=0 // loop_header
    %s13 = sphi 0, %s17
    %p14 = scmp.ge.s32.totalorder %s13, 6
    %s20 = sphi 0, %s39
    %s21 = sphi 0, %s35
    %s22 = sphi 0, %s31
    %s23 = sphi 0, %s20
    %s24 = sphi 0, %s21
    %s25 = sphi 0, %s22
    %s26 = sphi 0, %s23
    %s27 = sphi 0, %s24
    %s28 = sphi 0, %s25
    %s40 = sphi 0, %s40
    %s42 = sphi 0, %s40
    %s43 = sphi 0, %s42
    %s57 = sphi 0, %s43
    %s65 = sphi 0, %s67
    %s68 = sphi 0, %s65
    %s69 = sphi 0, %s68
    %s85 = sphi 0, %s69
    %s91 = sphi 0, %s93
    %s94 = sphi 0, %s91
    %s95 = sphi 0, %s94
    %s111 = sphi 0, %s95
    %s117 = sphi 0, %s119
    %s120 = sphi 0, %s117
    %s121 = sphi 0, %s120
    %s137 = sphi 0, %s121
    %s143 = sphi 0, %s145
    %s146 = sphi 0, %s143
    %s147 = sphi 0, %s146
    %s163 = sphi 0, %s147
    %s169 = sphi 0, %s171
    %s172 = sphi 0, %s169
    %s173 = sphi 0, %s172
    %s189 = sphi 0, %s173
    %s197 = sphi 0, %s199
    %s200 = sphi 0, %s197
    %s201 = sphi 0, %s200
    %s217 = sphi 0, %s201
  $region4: #{_hawkes_ll_device.1} parent=0 // loop_header_branch
    %16 = sbr.rel (%p14) target = $region8
  $region5: #{_hawkes_ll_device.1} parent=0 // loop_body
    %s18 = ssub.s32 %s13, 1
    %s19 = ssub.s32 %s13, 2
    %s29 = sadd.s32 1, %s22
    %p30 = scmp.ge.s32.totalorder %s29, 1
    %s31 = scalar_select %p30, 0, %s29
    %s32 = sadd.s32 1, %s21
    %s33 = scalar_select %p30, %s32, %s21
    %p34 = scmp.ge.s32.totalorder %s33, 1
    %s35 = scalar_select %p34, 0, %s33
    %s36 = sadd.s32 1, %s20
    %s37 = scalar_select %p34, %s36, %s20
    %p38 = scmp.ge.s32.totalorder %s37, 4
    %s39 = scalar_select %p38, 0, %s37
    %s41 = sadd.s32 %s40, 1
    %p44 = scmp.eq.s32.totalorder %s13, 3
    %p45 = scmp.ne.s32.totalorder %s40, %s42
    %p46 = scmp.eq.s32.totalorder %s13, 0
    %p47 = por %p45, %p46
    %p48 = scmp.ne.s32.totalorder %s40, %s42
    %p49 = scmp.eq.s32.totalorder %s18, 3
    %p50 = por %p48, %p49
    %p51 = scmp.ne.s32.totalorder %s42, %s43
    %p52 = scmp.eq.s32.totalorder %s18, 0
    %p53 = por %p51, %p52
    %p54 = scmp.ne.s32.totalorder %s42, %s43
    %p55 = scmp.eq.s32.totalorder %s19, 3
    %p56 = por %p54, %p55
    %p58 = scmp.ne.s32.totalorder %s43, %s57
    %p59 = scmp.eq.s32.totalorder %s19, 0
    %p60 = por %p58, %p59
    %s61 = sadd.s32 %s21, %s22
    %s62 = sadd.s32 %s35, %s31
    %s63 = ssub.s32 %s61, %s62
    %p64 = scmp.eq.s32.totalorder %s63, 0
    %s66 = sadd.s32 %s65, 1
    %s67 = scalar_select %p64, %s65, %s66
    %p70 = pneg %p64
    %p71 = scmp.eq.s32.totalorder %s13, 3
    %p72 = por %p70, %p71
    %p73 = scmp.ne.s32.totalorder %s65, %s68
    %p74 = scmp.eq.s32.totalorder %s13, 0
    %p75 = por %p73, %p74
    %p76 = scmp.ne.s32.totalorder %s65, %s68
    %p77 = scmp.eq.s32.totalorder %s18, 3
    %p78 = por %p76, %p77
    %p79 = scmp.ne.s32.totalorder %s68, %s69
    %p80 = scmp.eq.s32.totalorder %s18, 0
    %p81 = por %p79, %p80
    %p82 = scmp.ne.s32.totalorder %s68, %s69
    %p83 = scmp.eq.s32.totalorder %s19, 3
    %p84 = por %p82, %p83
    %p86 = scmp.ne.s32.totalorder %s69, %s85
    %p87 = scmp.eq.s32.totalorder %s19, 0
    %p88 = por %p86, %p87
    %s89 = ssub.s32 %s20, %s39
    %p90 = scmp.eq.s32.totalorder %s89, 0
    %s92 = sadd.s32 %s91, 1
    %s93 = scalar_select %p90, %s91, %s92
    %p96 = pneg %p90
    %p97 = scmp.eq.s32.totalorder %s13, 3
    %p98 = por %p96, %p97
    %p99 = scmp.ne.s32.totalorder %s91, %s94
    %p100 = scmp.eq.s32.totalorder %s13, 0
    %p101 = por %p99, %p100
    %p102 = scmp.ne.s32.totalorder %s91, %s94
    %p103 = scmp.eq.s32.totalorder %s18, 3
    %p104 = por %p102, %p103
    %p105 = scmp.ne.s32.totalorder %s94, %s95
    %p106 = scmp.eq.s32.totalorder %s18, 0
    %p107 = por %p105, %p106
    %p108 = scmp.ne.s32.totalorder %s94, %s95
    %p109 = scmp.eq.s32.totalorder %s19, 3
    %p110 = por %p108, %p109
    %p112 = scmp.ne.s32.totalorder %s95, %s111
    %p113 = scmp.eq.s32.totalorder %s19, 0
    %p114 = por %p112, %p113
    %s115 = ssub.s32 %s20, %s39
    %p116 = scmp.eq.s32.totalorder %s115, 0
    %s118 = sadd.s32 %s117, 1
    %s119 = scalar_select %p116, %s117, %s118
    %p122 = pneg %p116
    %p123 = scmp.eq.s32.totalorder %s13, 3
    %p124 = por %p122, %p123
    %p125 = scmp.ne.s32.totalorder %s117, %s120
    %p126 = scmp.eq.s32.totalorder %s13, 0
    %p127 = por %p125, %p126
    %p128 = scmp.ne.s32.totalorder %s117, %s120
    %p129 = scmp.eq.s32.totalorder %s18, 3
    %p130 = por %p128, %p129
    %p131 = scmp.ne.s32.totalorder %s120, %s121
    %p132 = scmp.eq.s32.totalorder %s18, 0
    %p133 = por %p131, %p132
    %p134 = scmp.ne.s32.totalorder %s120, %s121
    %p135 = scmp.eq.s32.totalorder %s19, 3
    %p136 = por %p134, %p135
    %p138 = scmp.ne.s32.totalorder %s121, %s137
    %p139 = scmp.eq.s32.totalorder %s19, 0
    %p140 = por %p138, %p139
    %s141 = ssub.s32 %s20, %s39
    %p142 = scmp.eq.s32.totalorder %s141, 0
    %s144 = sadd.s32 %s143, 1
    %s145 = scalar_select %p142, %s143, %s144
    %p148 = pneg %p142
    %p149 = scmp.eq.s32.totalorder %s13, 3
    %p150 = por %p148, %p149
    %p151 = scmp.ne.s32.totalorder %s143, %s146
    %p152 = scmp.eq.s32.totalorder %s13, 0
    %p153 = por %p151, %p152
    %p154 = scmp.ne.s32.totalorder %s143, %s146
    %p155 = scmp.eq.s32.totalorder %s18, 3
    %p156 = por %p154, %p155
    %p157 = scmp.ne.s32.totalorder %s146, %s147
    %p158 = scmp.eq.s32.totalorder %s18, 0
    %p159 = por %p157, %p158
    %p160 = scmp.ne.s32.totalorder %s146, %s147
    %p161 = scmp.eq.s32.totalorder %s19, 3
    %p162 = por %p160, %p161
    %p164 = scmp.ne.s32.totalorder %s147, %s163
    %p165 = scmp.eq.s32.totalorder %s19, 0
    %p166 = por %p164, %p165
    %s167 = ssub.s32 %s20, %s39
    %p168 = scmp.eq.s32.totalorder %s167, 0
    %s170 = sadd.s32 %s169, 1
    %s171 = scalar_select %p168, %s169, %s170
    %p174 = pneg %p168
    %p175 = scmp.eq.s32.totalorder %s13, 3
    %p176 = por %p174, %p175
    %p177 = scmp.ne.s32.totalorder %s169, %s172
    %p178 = scmp.eq.s32.totalorder %s13, 0
    %p179 = por %p177, %p178
    %p180 = scmp.ne.s32.totalorder %s169, %s172
    %p181 = scmp.eq.s32.totalorder %s18, 3
    %p182 = por %p180, %p181
    %p183 = scmp.ne.s32.totalorder %s172, %s173
    %p184 = scmp.eq.s32.totalorder %s18, 0
    %p185 = por %p183, %p184
    %p186 = scmp.ne.s32.totalorder %s172, %s173
    %p187 = scmp.eq.s32.totalorder %s19, 3
    %p188 = por %p186, %p187
    %p190 = scmp.ne.s32.totalorder %s173, %s189
    %p191 = scmp.eq.s32.totalorder %s19, 0
    %p192 = por %p190, %p191
    %s193 = ssub.s32 %s21, %s35
    %s194 = ssub.s32 %s20, %s39
    %s195 = sor.u32 %s193, %s194
    %p196 = scmp.eq.s32.totalorder %s195, 0
    %s198 = sadd.s32 %s197, 1
    %s199 = scalar_select %p196, %s197, %s198
    %p202 = pneg %p196
    %p203 = scmp.eq.s32.totalorder %s13, 3
    %p204 = por %p202, %p203
    %p205 = scmp.ne.s32.totalorder %s197, %s200
    %p206 = scmp.eq.s32.totalorder %s13, 0
    %p207 = por %p205, %p206
    %p208 = scmp.ne.s32.totalorder %s197, %s200
    %p209 = scmp.eq.s32.totalorder %s18, 3
    %p210 = por %p208, %p209
    %p211 = scmp.ne.s32.totalorder %s200, %s201
    %p212 = scmp.eq.s32.totalorder %s18, 0
    %p213 = por %p211, %p212
    %p214 = scmp.ne.s32.totalorder %s200, %s201
    %p215 = scmp.eq.s32.totalorder %s19, 3
    %p216 = por %p214, %p215
    %p218 = scmp.ne.s32.totalorder %s201, %s217
    %p219 = scmp.eq.s32.totalorder %s19, 0
    %p220 = por %p218, %p219
    %p221 = scmp.le.s32.totalorder 1, %s13
    %p222 = scmp.lt.s32.totalorder %s13, 5
    %p223 = pnand %p221, %p222
    %p224 = pneg %p223
    // Predicated region
    $region9: #{_hawkes_ll_device.1} parent=5 // pred_check
      _
    $region10: #{_hawkes_ll_device.1} parent=5 // pred_check_branch
      %226 = sbr.rel (%p223) target = $region12
    $region11: #{_hawkes_ll_device.1} parent=5 // pred_region
      %s227 = ssub.s32 %s13, 1
      // Predicated region
      $region13: #{_hawkes_ll_device.1} parent=11 // pred_check
        %p228 = pneg %p53
      $region14: #{_hawkes_ll_device.1} parent=11 // pred_check_branch
        %230 = sbr.rel (%p228) target = $region16
      $region15: #{_hawkes_ll_device.1} parent=11 // pred_region
        _
      $region16: #{_hawkes_ll_device.1} parent=11 // pred_fallthru
        _
      // Predicated region
      $region17: #{_hawkes_ll_device.1} parent=11 // pred_check
        %p231 = pneg %p81
      $region18: #{_hawkes_ll_device.1} parent=11 // pred_check_branch
        %233 = sbr.rel (%p231) target = $region20
      $region19: #{_hawkes_ll_device.1} parent=11 // pred_region
        %s234 = sadd.s32 %s24, %s25
        %p235 = scmp.lt.s32.totalorder %s234, 0
        %s236 = scalar_select %p235, %s234, 0
        %s237 = scalar_lea.vmem %s1, %s236
        %s238 = sadd.s32 %s24, %s25
      $region20: #{_hawkes_ll_device.1} parent=11 // pred_fallthru
        _
    $region12: #{_hawkes_ll_device.1} parent=5 // pred_fallthru
      _
    %p239 = scmp.lt.s32.totalorder %s13, 4
    // Predicated region
    $region21: #{_hawkes_ll_device.1} parent=5 // pred_check
      %p240 = pneg %p239
    $region22: #{_hawkes_ll_device.1} parent=5 // pred_check_branch
      %242 = sbr.rel (%p240) target = $region24
    $region23: #{_hawkes_ll_device.1} parent=5 // pred_region
      // Predicated region
      $region25: #{_hawkes_ll_device.1} parent=23 // pred_check
        %p243 = pneg %p101
      $region26: #{_hawkes_ll_device.1} parent=23 // pred_check_branch
        %245 = sbr.rel (%p243) target = $region28
      $region27: #{_hawkes_ll_device.1} parent=23 // pred_region
        %p246 = scmp.lt.s32.totalorder %s20, 3
        %s247 = scalar_select %p246, %s20, 3
        %s248 = smul.addr %s247, 2
        %s249 = smul.addr %s248, 8
        %s250 = scalar_lea.vmem %s2, %s249
      $region28: #{_hawkes_ll_device.1} parent=23 // pred_fallthru
        _
      // Predicated region
      $region29: #{_hawkes_ll_device.1} parent=23 // pred_check
        %p251 = pneg %p127
      $region30: #{_hawkes_ll_device.1} parent=23 // pred_check_branch
        %253 = sbr.rel (%p251) target = $region32
      $region31: #{_hawkes_ll_device.1} parent=23 // pred_region
        %p254 = scmp.lt.s32.totalorder %s20, 3
        %s255 = scalar_select %p254, %s20, 3
        %s256 = scalar_lea.vmem %s3, %s255
      $region32: #{_hawkes_ll_device.1} parent=23 // pred_fallthru
        _
      // Predicated region
      $region33: #{_hawkes_ll_device.1} parent=23 // pred_check
        %p257 = pneg %p153
      $region34: #{_hawkes_ll_device.1} parent=23 // pred_check_branch
        %259 = sbr.rel (%p257) target = $region36
      $region35: #{_hawkes_ll_device.1} parent=23 // pred_region
        %p260 = scmp.lt.s32.totalorder %s20, 3
        %s261 = scalar_select %p260, %s20, 3
        %s262 = smul.addr %s261, 2
        %s263 = smul.addr %s262, 8
        %s264 = scalar_lea.vmem %s4, %s263
      $region36: #{_hawkes_ll_device.1} parent=23 // pred_fallthru
        _
      // Predicated region
      $region37: #{_hawkes_ll_device.1} parent=23 // pred_check
        %p265 = pneg %p179
      $region38: #{_hawkes_ll_device.1} parent=23 // pred_check_branch
        %267 = sbr.rel (%p265) target = $region40
      $region39: #{_hawkes_ll_device.1} parent=23 // pred_region
        %p268 = scmp.lt.s32.totalorder %s20, 3
        %s269 = scalar_select %p268, %s20, 3
        %s270 = smul.addr %s269, 2
        %s271 = smul.addr %s270, 8
        %s272 = scalar_lea.vmem %s5, %s271
      $region40: #{_hawkes_ll_device.1} parent=23 // pred_fallthru
        _
    $region24: #{_hawkes_ll_device.1} parent=5 // pred_fallthru
      _
    %p273 = scmp.le.s32.totalorder 1, %s13
    %p274 = scmp.lt.s32.totalorder %s13, 5
    %p275 = pnand %p273, %p274
    %p276 = pneg %p275
    // Predicated region
    $region41: #{_hawkes_ll_device.1} parent=5 // pred_check
      _
    $region42: #{_hawkes_ll_device.1} parent=5 // pred_check_branch
      %278 = sbr.rel (%p275) target = $region44
    $region43: #{_hawkes_ll_device.1} parent=5 // pred_region
      %s279 = ssub.s32 %s13, 1
      %p280 = pneg %p53
      %p281 = pneg %p50
      %s282 = sadd.s32 %s24, %s25
      %p283 = scmp.lt.s32.totalorder %s282, 0
      %s284 = scalar_select %p283, %s282, 0
      %s285 = scalar_lea.vmem %s1, %s284
      %p286 = pneg %p81
      %p287 = pneg %p78
      %p288 = scmp.lt.s32.totalorder %s23, 3
      %s289 = scalar_select %p288, %s23, 3
      %s290 = smul.addr %s289, 2
      %s291 = smul.addr %s290, 8
      %s292 = scalar_lea.vmem %s2, %s291
      %p293 = pneg %p107
      %p294 = pneg %p104
      %p295 = scmp.lt.s32.totalorder %s23, 3
      %s296 = scalar_select %p295, %s23, 3
      %s297 = scalar_lea.vmem %s3, %s296
      %p298 = pneg %p133
      %p299 = pneg %p130
      %p300 = scmp.lt.s32.totalorder %s23, 3
      %s301 = scalar_select %p300, %s23, 3
      %s302 = smul.addr %s301, 2
      %s303 = smul.addr %s302, 8
      %s304 = scalar_lea.vmem %s4, %s303
      %p305 = pneg %p159
      %p306 = pneg %p156
      %p307 = scmp.lt.s32.totalorder %s23, 3
      %s308 = scalar_select %p307, %s23, 3
      %s309 = smul.addr %s308, 2
      %s310 = smul.addr %s309, 8
      %s311 = scalar_lea.vmem %s5, %s310
      %p312 = pneg %p185
      %p313 = pneg %p182
      %p314 = pneg %p213
      %p315 = pneg %p210
      %p316 = scmp.lt.s32.totalorder %s24, 0
      %s317 = scalar_select %p316, %s24, 0
      %p318 = scmp.lt.s32.totalorder %s23, 3
      %s319 = scalar_select %p318, %s23, 3
      %s320 = smul.addr %s317, 4
      %s321 = sadd.s32 %s319, %s320
      %s322 = scalar_lea.vmem %s6, %s321
      %s323 = sadd.s32 %s24, %s25
      %p324 = scmp.lt.s32.totalorder %s323, 0
      %s325 = scalar_select %p324, %s323, 0
      %s326 = scalar_lea.vmem %s1, %s325
      %s327 = sadd.s32 %s24, %s25
      %p328 = scmp.lt.s32.totalorder %s23, 3
      %s329 = scalar_select %p328, %s23, 3
      %s330 = smul.addr %s329, 2
      %s331 = smul.addr %s330, 8
      %s332 = scalar_lea.vmem %s2, %s331
      %p333 = scmp.lt.s32.totalorder %s23, 3
      %s334 = scalar_select %p333, %s23, 3
      %s335 = scalar_lea.vmem %s3, %s334
      %p336 = scmp.lt.s32.totalorder %s23, 3
      %s337 = scalar_select %p336, %s23, 3
      %s338 = smul.addr %s337, 2
      %s339 = smul.addr %s338, 8
      %s340 = scalar_lea.vmem %s4, %s339
      %p341 = scmp.lt.s32.totalorder %s23, 3
      %s342 = scalar_select %p341, %s23, 3
      %s343 = smul.addr %s342, 2
      %s344 = smul.addr %s343, 8
      %s345 = scalar_lea.vmem %s5, %s344
      %p346 = scmp.lt.s32.totalorder %s24, 0
      %s347 = scalar_select %p346, %s24, 0
      %p348 = scmp.lt.s32.totalorder %s23, 3
      %s349 = scalar_select %p348, %s23, 3
      %s350 = smul.addr %s347, 4
      %s351 = sadd.s32 %s349, %s350
      %s352 = scalar_lea.vmem %s6, %s351
      %p354 = scmp.eq.s32.totalorder %s25, 0
      // Predicated region
      $region45: #{_hawkes_ll_device.1} parent=43 // pred_check
        %p355 = pneg %p354
      $region46: #{_hawkes_ll_device.1} parent=43 // pred_check_branch
        %357 = sbr.rel (%p355) target = $region48
      $region47: #{_hawkes_ll_device.1} parent=43 // pred_region
        %vm358 = vcmask 7168
        %359 = vst.msk [vmem:[#allocation2] sm:$0xff] %vm358, 0.0
        %360 = vst.msk [vmem:[#allocation2 + $0x8] sm:$0xff] %vm358, 0.0
      $region48: #{_hawkes_ll_device.1} parent=43 // pred_fallthru
        _
      %s361 = sadd.s32 %s24, %s25
      %s362 = sld [smem:[#allocation3 + %s361]]
      %v363 = vld [vmem:[%s326] sm:$0x1]
      %v364 = vld [vmem:[%s332] sm:$0xff]
      %v365 = vld [vmem:[%s332 + $0x8] sm:$0xff]
      %v366 = vld [vmem:[%s335] sm:$0x1]
      %v367 = vld [vmem:[%s345] sm:$0xff]
      %v368 = vld [vmem:[%s345 + $0x8] sm:$0xff]
      %370 = vset.pattern.permute.xlu0 0
      %371 = vperm.xlu0 %370, %v364
      %v372 = vpop.permute.xlu0 %371
      %375 = vset.pattern.permute.xlu0 0
      %376 = vperm.xlu0 %375, %v365
      %v377 = vpop.permute.xlu0 %376
      %v380 = vperm.slane %v363, 0
      %vm382 = vcmp.gt.f32.partialorder %v372, %v380
      %vm383 = vcmp.gt.f32.partialorder %v377, %v380
      %v384 = vsel %vm382, 1, 0
      %v385 = vsel %vm383, 1, 0
      %v386 = vcvt.s32.f32 %v384
      %v387 = vcvt.s32.f32 %v385
      %v388 = vpack.c.bf16 %v387, %v386
      %v389 = vstv %s362
      %v390 = vsub.f32 %v389, %v366
      %392 = vset.pattern.permute.xlu0 0
      %393 = vperm.xlu0 %392, %v367
      %v394 = vpop.permute.xlu0 %393
      %397 = vset.pattern.permute.xlu0 0
      %398 = vperm.xlu0 %397, %v368
      %v399 = vpop.permute.xlu0 %398
      %v402 = vperm.slane %v390, 0
      %v404 = vmul.f32 %v394, %v402
      %v405 = vmul.f32 %v399, %v402
      %v406 = vmin.f32 %v404, 85.0
      %v407 = vmin.f32 %v405, 85.0
      %v408 = vmul.f32 %v406, 1.442695
      %v409 = vpow.pop %v408
      %v410 = vmul.f32 %v407, 1.442695
      %v411 = vpow.pop %v410
      %v412 = vpack.c.bf16 %v411, %v409
      %vm413 = vcmask 130048
      %v415 = vsel %vm413, %v412, 0
      %417 = vmatpush.bf16.msra.mxu0 0
      %418 = vmatpush.bf16.msra.mxu0 0
      %419 = vmatpush.bf16.msra.mxu0 0
      %420 = vmatpush.bf16.msra.mxu0 0
      %421 = vmatpush.bf16.msra.mxu0 0
      %422 = vmatpush.bf16.msra.mxu0 0
      %423 = vmatpush.bf16.msra.mxu0 0
      %424 = vmatpush.bf16.msra.mxu0 %v388
      %425 = vmatmul.bf16.gmra.mxu0 %v415
      %v426 = vpop.f32.mrf.mxu0
      %v427 = vadd.f32 0.0, %v426
      %v428 = vpop.f32.mrf.mxu0
      %v429 = vadd.f32 0.0, %v428
      %430 = vdwg.mxu0
      %v431 = vsub.f32 %v363, %v389
      %v433 = vperm.slane %v431, 0
      %v435 = vmul.f32 %v394, %v433
      %v436 = vmul.f32 %v399, %v433
      %v437 = vmin.f32 %v435, 85.0
      %v438 = vmin.f32 %v436, 85.0
      %v439 = vmul.f32 %v437, 1.442695
      %v440 = vpow.pop %v439
      %v441 = vmul.f32 %v438, 1.442695
      %v442 = vpow.pop %v441
      %v443 = vld [vmem:[#allocation2] sm:$0xff]
      %v444 = vld [vmem:[#allocation2 + $0x8] sm:$0xff]
      %v445 = vmul.f32 %v440, %v427
      %v446 = vmul.f32 %v442, %v429
      %447 = vadd.xlane.f32.xlu0 %v445
      %v448 = vpop.xlane.xlu0 %447
      %449 = vadd.xlane.f32.xlu0 %v446
      %v450 = vpop.xlane.xlu0 %449
      %v451 = vadd.f32 %v443, %v448
      %v452 = vadd.f32 %v444, %v450
      %vm453 = vcmask 7168
      %454 = vst.msk [vmem:[#allocation2] sm:$0xff] %vm453, %v451
      %455 = vst.msk [vmem:[#allocation2 + $0x8] sm:$0xff] %vm453, %v452
      // Predicated region
      $region49: #{_hawkes_ll_device.1} parent=43 // pred_check
        %p456 = pneg %p354
      $region50: #{_hawkes_ll_device.1} parent=43 // pred_check_branch
        %458 = sbr.rel (%p456) target = $region52
      $region51: #{_hawkes_ll_device.1} parent=43 // pred_region
        %v459 = vld [vmem:[%s340] sm:$0xff]
        %v460 = vld [vmem:[%s340 + $0x8] sm:$0xff]
        %v461 = vld [vmem:[#allocation2] sm:$0xff]
        %v462 = vld [vmem:[#allocation2 + $0x8] sm:$0xff]
        %v463 = vmul.f32 %v459, %v461
        %v464 = vmul.f32 %v460, %v462
        %v465 = vsel %vm453, %v463, 0.0
        %v466 = vsel %vm453, %v464, 0.0
        %v467 = vadd.f32 %v465, %v466
        %v468 = vrot.slane %v467, 4
        %v469 = vadd.f32 %v467, %v468
        %v470 = vrot.slane %v469, 2
        %v471 = vadd.f32 %v469, %v470
        %v472 = vrot.slane %v471, 1
        %v473 = vadd.f32 %v471, %v472
        %vm474 = vcmask 0
        %475 = vst.msk [vmem:[%s352] sm:$0x1] %vm474, %v473
      $region52: #{_hawkes_ll_device.1} parent=43 // pred_fallthru
        _
      %p476 = scmp.lt.s32.totalorder %s24, 0
      %s477 = scalar_select %p476, %s24, 0
      %p478 = scmp.lt.s32.totalorder %s23, 3
      %s479 = scalar_select %p478, %s23, 3
      %s480 = smul.addr %s477, 4
      %s481 = sadd.s32 %s479, %s480
      %s482 = scalar_lea.vmem %s6, %s481
      // Predicated region
      $region53: #{_hawkes_ll_device.1} parent=43 // pred_check
        %p483 = pneg %p210
      $region54: #{_hawkes_ll_device.1} parent=43 // pred_check_branch
        %485 = sbr.rel (%p483) target = $region56
      $region55: #{_hawkes_ll_device.1} parent=43 // pred_region
        _
      $region56: #{_hawkes_ll_device.1} parent=43 // pred_fallthru
        _
    $region44: #{_hawkes_ll_device.1} parent=5 // pred_fallthru
      _
    %p486 = scmp.le.s32.totalorder 2, %s13
    // Predicated region
    $region57: #{_hawkes_ll_device.1} parent=5 // pred_check
      %p487 = pneg %p486
    $region58: #{_hawkes_ll_device.1} parent=5 // pred_check_branch
      %489 = sbr.rel (%p487) target = $region60
    $region59: #{_hawkes_ll_device.1} parent=5 // pred_region
      %s490 = ssub.s32 %s13, 2
      // Predicated region
      $region61: #{_hawkes_ll_device.1} parent=59 // pred_check
        %p491 = pneg %p216
      $region62: #{_hawkes_ll_device.1} parent=59 // pred_check_branch
        %493 = sbr.rel (%p491) target = $region64
      $region63: #{_hawkes_ll_device.1} parent=59 // pred_region
        %p494 = scmp.lt.s32.totalorder %s27, 0
        %s495 = scalar_select %p494, %s27, 0
        %p496 = scmp.lt.s32.totalorder %s26, 3
        %s497 = scalar_select %p496, %s26, 3
        %s498 = smul.addr %s495, 4
        %s499 = sadd.s32 %s497, %s498
        %s500 = scalar_lea.vmem %s6, %s499
      $region64: #{_hawkes_ll_device.1} parent=59 // pred_fallthru
        _
    $region60: #{_hawkes_ll_device.1} parent=5 // pred_fallthru
      _
  $region6: #{_hawkes_ll_device.1} parent=0 // loop_footer
    %s17 = sadd.s32 1, %s13
  $region7: #{_hawkes_ll_device.1} parent=0 // loop_footer_branch
    %12 = sbr.rel target = $region3
  $region8: #{_hawkes_ll_device.1} parent=0 // loop_exit
    _

</llo_original>
